<compile_context>
chip_gen: v5e
topology: v5e:2x2
jax: 0.10.0
libtpu: 0.0.40
codegen_flags: <defaults>
</compile_context>

<pallas_src>
import functools

import jax
import jax.numpy as jnp
from jax.experimental import pallas as pl
from jax.experimental.pallas import tpu as pltpu


def _flash_attn_kernel(xq_ref, kT_ref, v_ref, wq_ref, wo_ref, bo_ref, o_ref,
                       q_sc, m_sc, l_sc, acc_sc, oacc_sc,
                       *, scale, exp_dtype):
    h = pl.program_id(2)
    ki = pl.program_id(3)
    nh = pl.num_programs(2)
    nk = pl.num_programs(3)

    # Zero the output-projection accumulator at the start of every (b, q-tile).
    @pl.when((h == 0) & (ki == 0))
    def _():
        oacc_sc[...] = jnp.zeros_like(oacc_sc)

    # Per-head query projection (softmax scale folded in once) + state reset.
    @pl.when(ki == 0)
    def _():
        q = jnp.dot(xq_ref[0], wq_ref[0],
                    preferred_element_type=jnp.float32)        # (tq, dh) f32
        q_sc[...] = (q * scale).astype(q_sc.dtype)
        m_sc[...] = jnp.full_like(m_sc, -jnp.inf)
        l_sc[...] = jnp.zeros_like(l_sc)
        acc_sc[...] = jnp.zeros_like(acc_sc)

    kT = kT_ref[0, 0]                                          # (dh, tk)
    v = v_ref[0, 0]                                            # (tk, dh)

    # scores = (scale * q) @ k^T, with K already pre-transposed host-side.
    s = jnp.dot(q_sc[...], kT, preferred_element_type=jnp.float32)  # (tq, tk)

    # Online softmax update (f32 statistics; exp in exp_dtype).
    m_prev = m_sc[...]
    m_new = jnp.maximum(m_prev, jnp.max(s, axis=-1, keepdims=True))
    alpha = jnp.exp(m_prev - m_new)
    p = jnp.exp((s - m_new).astype(exp_dtype))
    l_sc[...] = alpha * l_sc[...] + jnp.sum(p.astype(jnp.float32),
                                            axis=-1, keepdims=True)
    acc_sc[...] = alpha * acc_sc[...] + jnp.dot(p.astype(v.dtype), v,
                                                preferred_element_type=jnp.float32)
    m_sc[...] = m_new

    # End of kv reduction for this head: normalize once and fold this head
    # straight into the output-projection accumulator.
    # TODO(synk): if dim_head is 128-aligned, a single fat (tq, inner) x
    # (inner, D) projection after the head loop would use full MXU depth.
    @pl.when(ki == nk - 1)
    def _():
        attn = acc_sc[...] * pl.reciprocal(l_sc[...], approx=False)  # (tq, dh)
        oacc_sc[...] += jnp.dot(attn.astype(wo_ref.dtype), wo_ref[0],
                                preferred_element_type=jnp.float32)  # (tq, D)

    # Last head, last kv tile: add bias and write the output tile.
    @pl.when((h == nh - 1) & (ki == nk - 1))
    def _():
        o_ref[0] = (oacc_sc[...] + bo_ref[...]).astype(o_ref.dtype)


def prepare_cross_attention_params(wq, wk, wv, wo, bo, *, heads, dim_head):
    """One-time per-head weight re-layout (hoisted out of the per-call path)."""
    D = wq.shape[0]
    Dc = wk.shape[0]
    inner = heads * dim_head
    Dout = wo.shape[1]
    assert wq.shape == (D, inner)
    assert wk.shape == (Dc, inner) and wv.shape == (Dc, inner)
    assert wo.shape == (inner, Dout) and bo.shape == (Dout,)
    wq_h = wq.reshape(D, heads, dim_head).transpose(1, 0, 2)   # (H, D, dh)
    wo_h = wo.reshape(heads, dim_head, Dout)                   # (H, dh, Dout)
    bo2 = bo.reshape(1, Dout)
    return dict(wq_h=wq_h, wk=wk, wv=wv, wo_h=wo_h, bo2=bo2)


def _pick_tile(n, preferred=512):
    if n <= preferred:
        return n
    for t in (preferred, 256, 128):
        if n % t == 0:
            return t
    return n


def cross_attention_pallas(x, params, *, heads, dim_head, context=None,
                           tq=None, tk=None):
    """x: (B, S, query_dim); context (optional): (B, S_kv, cross_dim)."""
    B, S, D = x.shape
    ctx = x if context is None else context
    Bc, Sk, Dc = ctx.shape
    assert Bc == B

    wq_h = params["wq_h"]
    wk = params["wk"]
    wv = params["wv"]
    wo_h = params["wo_h"]
    bo2 = params["bo2"]
    Dout = wo_h.shape[-1]
    assert wq_h.shape == (heads, D, dim_head)
    assert wk.shape[0] == Dc and wv.shape[0] == Dc

    scale = float(dim_head) ** -0.5

    if tq is None:
        tq = _pick_tile(S)
    if tk is None:
        tk = _pick_tile(Sk)
    assert S % tq == 0 and Sk % tk == 0

    # K/V precompute: one lane-dense matmul each, then per-head layouts.
    # K is stored pre-transposed (B, H, dh, Sk) -> score matmul needs no
    # in-kernel transpose.
    k = (ctx @ wk).reshape(B, Sk, heads, dim_head)
    v = (ctx @ wv).reshape(B, Sk, heads, dim_head)
    k_t = jnp.transpose(k, (0, 2, 3, 1)).astype(x.dtype)       # (B, H, dh, Sk)
    v_h = jnp.transpose(v, (0, 2, 1, 3)).astype(x.dtype)       # (B, H, Sk, dh)

    exp_dtype = jnp.bfloat16 if x.dtype == jnp.bfloat16 else jnp.float32
    kernel = functools.partial(_flash_attn_kernel, scale=scale,
                               exp_dtype=exp_dtype)

    grid = (B, S // tq, heads, Sk // tk)

    # TODO(synk): if query_dim is not a multiple of 128 (e.g. 320), pad the
    # output channel dim to the next multiple of 128 outside the kernel for
    # fully lane-dense stores.
    return pl.pallas_call(
        kernel,
        out_shape=jax.ShapeDtypeStruct((B, S, Dout), x.dtype),
        grid_spec=pltpu.PrefetchScalarGridSpec(
            num_scalar_prefetch=0,
            grid=grid,
            in_specs=[
                # hidden_states tile for queries (resident across h, kv)
                pl.BlockSpec((1, tq, D), lambda b, qi, h, ki: (b, qi, 0)),
                # precomputed per-head K^T tile (dh, tk)
                pl.BlockSpec((1, 1, dim_head, tk),
                             lambda b, qi, h, ki: (b, h, 0, ki)),
                # precomputed per-head V tile (tk, dh)
                pl.BlockSpec((1, 1, tk, dim_head),
                             lambda b, qi, h, ki: (b, h, ki, 0)),
                # per-head Wq slice
                pl.BlockSpec((1, D, dim_head), lambda b, qi, h, ki: (h, 0, 0)),
                # per-head Wo slice
                pl.BlockSpec((1, dim_head, Dout), lambda b, qi, h, ki: (h, 0, 0)),
                # output bias
                pl.BlockSpec((1, Dout), lambda b, qi, h, ki: (0, 0)),
            ],
            out_specs=pl.BlockSpec((1, tq, Dout), lambda b, qi, h, ki: (b, qi, 0)),
            scratch_shapes=[
                pltpu.VMEM((tq, dim_head), x.dtype),      # scaled q (current head)
                pltpu.VMEM((tq, 1), jnp.float32),         # running max
                pltpu.VMEM((tq, 1), jnp.float32),         # running denom
                pltpu.VMEM((tq, dim_head), jnp.float32),  # per-head PV accumulator
                pltpu.VMEM((tq, Dout), jnp.float32),      # output-proj accumulator
            ],
        ),
        compiler_params=pltpu.CompilerParams(
            dimension_semantics=("parallel", "parallel", "arbitrary", "arbitrary"),
            # Safe on v7x (64 MiB physical VMEM); tiles above fit comfortably.
            vmem_limit_bytes=48 * 1024 * 1024,
        ),
    )(x, k_t, v_h, wq_h, wo_h, bo2)


def cross_attention_reference(x, wq, wk, wv, wo, bo, *, heads, dim_head,
                              context=None):
    """Pure-JAX reference mirroring the PyTorch forward."""
    B, S, D = x.shape
    ctx = x if context is None else context
    Sk = ctx.shape[1]
    scale = float(dim_head) ** -0.5
    q = x @ wq
    k = ctx @ wk
    v = ctx @ wv

    def split_heads(t, L):
        t = t.reshape(B, L, heads, dim_head).transpose(0, 2, 1, 3)
        return t.reshape(B * heads, L, dim_head)

    q, k, v = split_heads(q, S), split_heads(k, Sk), split_heads(v, Sk)
    scores = scale * jnp.einsum('bqd,bkd->bqk', q, k)
    probs = jax.nn.softmax(scores, axis=-1)
    out = jnp.einsum('bqk,bkd->bqd', probs, v)
    out = out.reshape(B, heads, S, dim_head).transpose(0, 2, 1, 3)
    out = out.reshape(B, S, heads * dim_head)
    return out @ wo + bo[None, None, :]


if __name__ == "__main__":
    # Small, forward-consistent shapes.
    B, S = 2, 16
    query_dim = 32
    heads = 4
    dim_head = 8
    inner_dim = heads * dim_head  # 32

    key = jax.random.PRNGKey(0)
    kx, kq, kk, kv, ko, kb = jax.random.split(key, 6)

    x = jax.random.normal(kx, (B, S, query_dim), dtype=jnp.float32)
    wq = jax.random.normal(kq, (query_dim, inner_dim), dtype=jnp.float32) * 0.05
    wk = jax.random.normal(kk, (query_dim, inner_dim), dtype=jnp.float32) * 0.05
    wv = jax.random.normal(kv, (query_dim, inner_dim), dtype=jnp.float32) * 0.05
    wo = jax.random.normal(ko, (inner_dim, query_dim), dtype=jnp.float32) * 0.05
    bo = jax.random.normal(kb, (query_dim,), dtype=jnp.float32) * 0.01

    params = prepare_cross_attention_params(wq, wk, wv, wo, bo,
                                            heads=heads, dim_head=dim_head)

    out = cross_attention_pallas(x, params, heads=heads, dim_head=dim_head)
    out = jax.block_until_ready(out)

    ref = cross_attention_reference(x, wq, wk, wv, wo, bo,
                                    heads=heads, dim_head=dim_head)
    assert out.shape == (B, S, query_dim)
    assert jnp.allclose(out, ref, atol=1e-3, rtol=1e-3), \
        "Pallas output mismatch vs reference"

    # TODO(synk): attention_mask, group_norm, added_kv_proj_dim, dropout>0 and
    # sliced-attention / xformers branches are not exercised in this default
    # configuration.
    print("KERNEL_OK")
</pallas_src>

<mosaic_0001>
module attributes {stable_mosaic.version = 11 : i64} {
  func.func @_flash_attn_kernel(%arg0: i32, %arg1: i32, %arg2: i32, %arg3: i32, %arg4: memref<1x16x32xf32, #tpu.memory_space<vmem>>, %arg5: memref<1x1x8x16xf32, #tpu.memory_space<vmem>>, %arg6: memref<1x1x16x8xf32, #tpu.memory_space<vmem>>, %arg7: memref<1x32x8xf32, #tpu.memory_space<vmem>>, %arg8: memref<1x8x32xf32, #tpu.memory_space<vmem>>, %arg9: memref<1x32xf32, #tpu.memory_space<vmem>>, %arg10: memref<1x16x32xf32, #tpu.memory_space<vmem>>, %arg11: memref<16x8xf32, #tpu.memory_space<vmem>>, %arg12: memref<16x1xf32, #tpu.memory_space<vmem>>, %arg13: memref<16x1xf32, #tpu.memory_space<vmem>>, %arg14: memref<16x8xf32, #tpu.memory_space<vmem>>, %arg15: memref<16x32xf32, #tpu.memory_space<vmem>>) attributes {dimension_semantics = [#tpu.dimension_semantics<parallel>, #tpu.dimension_semantics<parallel>, #tpu.dimension_semantics<arbitrary>, #tpu.dimension_semantics<arbitrary>], iteration_bounds = array<i64: 2, 1, 4, 1>, scalar_prefetch = 0 : i64, scratch_operands = 5 : i64, tpu.core_type = #tpu.core_type<tc>, window_params = [{transform_indices = @transform_0, window_bounds = array<i64: 1, 16, 32>}, {transform_indices = @transform_1, window_bounds = array<i64: 1, 1, 8, 16>}, {transform_indices = @transform_2, window_bounds = array<i64: 1, 1, 16, 8>}, {transform_indices = @transform_3, window_bounds = array<i64: 1, 32, 8>}, {transform_indices = @transform_4, window_bounds = array<i64: 1, 8, 32>}, {pipeline_mode = #tpu.pipeline_mode<synchronous>, transform_indices = @transform_5, window_bounds = array<i64: 1, 32>}, {transform_indices = @transform_6, window_bounds = array<i64: 1, 16, 32>}]} {
    %c0_i32 = arith.constant 0 : i32
    %0 = arith.cmpi eq, %arg2, %c0_i32 : i32
    %c0_i32_0 = arith.constant 0 : i32
    %1 = arith.cmpi eq, %arg3, %c0_i32_0 : i32
    %2 = arith.andi %0, %1 : i1
    %3 = arith.extui %2 : i1 to i32
    %c0_i32_1 = arith.constant 0 : i32
    %4 = arith.cmpi ne, %3, %c0_i32_1 : i32
    scf.if %4 {
      %cst_32 = arith.constant 0.000000e+00 : f32
      %44 = vector.broadcast %cst_32 : f32 to vector<16x32xf32>
      %c0_33 = arith.constant 0 : index
      %c0_34 = arith.constant 0 : index
      %45 = vector.load %arg15[%c0_33, %c0_34] : memref<16x32xf32, #tpu.memory_space<vmem>>, vector<16x32xf32>
      tpu.vector_store %arg15[%c0_33, %c0_34], %44 {strides = array<i32>} : memref<16x32xf32, #tpu.memory_space<vmem>>, vector<16x32xf32>,
    } else {
    }
    %c0_i32_2 = arith.constant 0 : i32
    %5 = arith.cmpi eq, %arg3, %c0_i32_2 : i32
    %6 = arith.extui %5 : i1 to i32
    %c0_i32_3 = arith.constant 0 : i32
    %7 = arith.cmpi ne, %6, %c0_i32_3 : i32
    scf.if %7 {
      %c0_32 = arith.constant 0 : index
      %c0_33 = arith.constant 0 : index
      %c0_34 = arith.constant 0 : index
      %44 = vector.load %arg4[%c0_32, %c0_33, %c0_34] : memref<1x16x32xf32, #tpu.memory_space<vmem>>, vector<1x16x32xf32>
      %45 = vector.shape_cast %44 : vector<1x16x32xf32> to vector<16x32xf32>
      %c0_35 = arith.constant 0 : index
      %c0_36 = arith.constant 0 : index
      %c0_37 = arith.constant 0 : index
      %46 = vector.load %arg7[%c0_35, %c0_36, %c0_37] : memref<1x32x8xf32, #tpu.memory_space<vmem>>, vector<1x32x8xf32>
      %47 = vector.shape_cast %46 : vector<1x32x8xf32> to vector<32x8xf32>
      %cst_38 = arith.constant dense<0.000000e+00> : vector<16x8xf32>
      %48 = tpu.matmul %45, %47, %cst_38 {dimension_numbers = #tpu.dot_dimension_numbers<[1], [0], [0], [1], [0, 0, 1, 1], [], []>} : vector<16x32xf32>, vector<32x8xf32>, vector<16x8xf32> -> vector<16x8xf32>
      %cst_39 = arith.constant 0.353553385 : f32
      %49 = vector.broadcast %cst_39 : f32 to vector<16x8xf32>
      %50 = arith.mulf %48, %49 : vector<16x8xf32>
      %c0_40 = arith.constant 0 : index
      %c0_41 = arith.constant 0 : index
      %51 = vector.load %arg11[%c0_40, %c0_41] : memref<16x8xf32, #tpu.memory_space<vmem>>, vector<16x8xf32>
      tpu.vector_store %arg11[%c0_40, %c0_41], %50 {strides = array<i32>} : memref<16x8xf32, #tpu.memory_space<vmem>>, vector<16x8xf32>,
      %cst_42 = arith.constant 0xFF800000 : f32
      %52 = vector.broadcast %cst_42 : f32 to vector<16x1xf32>
      %c0_43 = arith.constant 0 : index
      %c0_44 = arith.constant 0 : index
      %53 = vector.load %arg12[%c0_43, %c0_44] : memref<16x1xf32, #tpu.memory_space<vmem>>, vector<16x1xf32>
      tpu.vector_store %arg12[%c0_43, %c0_44], %52 {strides = array<i32>} : memref<16x1xf32, #tpu.memory_space<vmem>>, vector<16x1xf32>,
      %cst_45 = arith.constant 0.000000e+00 : f32
      %54 = vector.broadcast %cst_45 : f32 to vector<16x1xf32>
      %c0_46 = arith.constant 0 : index
      %c0_47 = arith.constant 0 : index
      %55 = vector.load %arg13[%c0_46, %c0_47] : memref<16x1xf32, #tpu.memory_space<vmem>>, vector<16x1xf32>
      tpu.vector_store %arg13[%c0_46, %c0_47], %54 {strides = array<i32>} : memref<16x1xf32, #tpu.memory_space<vmem>>, vector<16x1xf32>,
      %cst_48 = arith.constant 0.000000e+00 : f32
      %56 = vector.broadcast %cst_48 : f32 to vector<16x8xf32>
      %c0_49 = arith.constant 0 : index
      %c0_50 = arith.constant 0 : index
      %57 = vector.load %arg14[%c0_49, %c0_50] : memref<16x8xf32, #tpu.memory_space<vmem>>, vector<16x8xf32>
      tpu.vector_store %arg14[%c0_49, %c0_50], %56 {strides = array<i32>} : memref<16x8xf32, #tpu.memory_space<vmem>>, vector<16x8xf32>,
    } else {
    }
    %c0 = arith.constant 0 : index
    %c0_4 = arith.constant 0 : index
    %c0_5 = arith.constant 0 : index
    %c0_6 = arith.constant 0 : index
    %8 = vector.load %arg5[%c0, %c0_4, %c0_5, %c0_6] : memref<1x1x8x16xf32, #tpu.memory_space<vmem>>, vector<1x1x8x16xf32>
    %9 = vector.shape_cast %8 : vector<1x1x8x16xf32> to vector<8x16xf32>
    %c0_7 = arith.constant 0 : index
    %c0_8 = arith.constant 0 : index
    %c0_9 = arith.constant 0 : index
    %c0_10 = arith.constant 0 : index
    %10 = vector.load %arg6[%c0_7, %c0_8, %c0_9, %c0_10] : memref<1x1x16x8xf32, #tpu.memory_space<vmem>>, vector<1x1x16x8xf32>
    %11 = vector.shape_cast %10 : vector<1x1x16x8xf32> to vector<16x8xf32>
    %c0_11 = arith.constant 0 : index
    %c0_12 = arith.constant 0 : index
    %12 = vector.load %arg11[%c0_11, %c0_12] : memref<16x8xf32, #tpu.memory_space<vmem>>, vector<16x8xf32>
    %cst = arith.constant dense<0.000000e+00> : vector<16x16xf32>
    %13 = tpu.matmul %12, %9, %cst {dimension_numbers = #tpu.dot_dimension_numbers<[1], [0], [0], [1], [0, 0, 1, 1], [], []>} : vector<16x8xf32>, vector<8x16xf32>, vector<16x16xf32> -> vector<16x16xf32>
    %c0_13 = arith.constant 0 : index
    %c0_14 = arith.constant 0 : index
    %14 = vector.load %arg12[%c0_13, %c0_14] : memref<16x1xf32, #tpu.memory_space<vmem>>, vector<16x1xf32>
    %cst_15 = arith.constant dense<0xFF800000> : vector<16xf32>
    %15 = vector.multi_reduction <maximumf>, %13, %cst_15 [1] : vector<16x16xf32> to vector<16xf32>
    %16 = vector.shape_cast %15 : vector<16xf32> to vector<16x1xf32>
    %17 = arith.maximumf %14, %16 : vector<16x1xf32>
    %18 = arith.subf %14, %17 : vector<16x1xf32>
    %19 = math.exp %18 : vector<16x1xf32>
    %20 = vector.broadcast %17 : vector<16x1xf32> to vector<16x16xf32>
    %21 = arith.subf %13, %20 : vector<16x16xf32>
    %22 = math.exp %21 : vector<16x16xf32>
    %c0_16 = arith.constant 0 : index
    %c0_17 = arith.constant 0 : index
    %23 = vector.load %arg13[%c0_16, %c0_17] : memref<16x1xf32, #tpu.memory_space<vmem>>, vector<16x1xf32>
    %24 = arith.mulf %19, %23 : vector<16x1xf32>
    %cst_18 = arith.constant dense<0.000000e+00> : vector<16xf32>
    %25 = vector.multi_reduction <add>, %22, %cst_18 [1] : vector<16x16xf32> to vector<16xf32>
    %26 = vector.shape_cast %25 : vector<16xf32> to vector<16x1xf32>
    %27 = arith.addf %24, %26 : vector<16x1xf32>
    %c0_19 = arith.constant 0 : index
    %c0_20 = arith.constant 0 : index
    %28 = vector.load %arg13[%c0_19, %c0_20] : memref<16x1xf32, #tpu.memory_space<vmem>>, vector<16x1xf32>
    tpu.vector_store %arg13[%c0_19, %c0_20], %27 {strides = array<i32>} : memref<16x1xf32, #tpu.memory_space<vmem>>, vector<16x1xf32>,
    %c0_21 = arith.constant 0 : index
    %c0_22 = arith.constant 0 : index
    %29 = vector.load %arg14[%c0_21, %c0_22] : memref<16x8xf32, #tpu.memory_space<vmem>>, vector<16x8xf32>
    %30 = vector.broadcast %19 : vector<16x1xf32> to vector<16x8xf32>
    %31 = arith.mulf %30, %29 : vector<16x8xf32>
    %cst_23 = arith.constant dense<0.000000e+00> : vector<16x8xf32>
    %32 = tpu.matmul %22, %11, %cst_23 {dimension_numbers = #tpu.dot_dimension_numbers<[1], [0], [0], [1], [0, 0, 1, 1], [], []>} : vector<16x16xf32>, vector<16x8xf32>, vector<16x8xf32> -> vector<16x8xf32>
    %33 = arith.addf %31, %32 : vector<16x8xf32>
    %c0_24 = arith.constant 0 : index
    %c0_25 = arith.constant 0 : index
    %34 = vector.load %arg14[%c0_24, %c0_25] : memref<16x8xf32, #tpu.memory_space<vmem>>, vector<16x8xf32>
    tpu.vector_store %arg14[%c0_24, %c0_25], %33 {strides = array<i32>} : memref<16x8xf32, #tpu.memory_space<vmem>>, vector<16x8xf32>,
    %c0_26 = arith.constant 0 : index
    %c0_27 = arith.constant 0 : index
    %35 = vector.load %arg12[%c0_26, %c0_27] : memref<16x1xf32, #tpu.memory_space<vmem>>, vector<16x1xf32>
    tpu.vector_store %arg12[%c0_26, %c0_27], %17 {strides = array<i32>} : memref<16x1xf32, #tpu.memory_space<vmem>>, vector<16x1xf32>,
    %c0_i32_28 = arith.constant 0 : i32
    %36 = arith.cmpi eq, %arg3, %c0_i32_28 : i32
    %37 = arith.extui %36 : i1 to i32
    %c0_i32_29 = arith.constant 0 : i32
    %38 = arith.cmpi ne, %37, %c0_i32_29 : i32
    scf.if %38 {
      %c0_32 = arith.constant 0 : index
      %c0_33 = arith.constant 0 : index
      %44 = vector.load %arg14[%c0_32, %c0_33] : memref<16x8xf32, #tpu.memory_space<vmem>>, vector<16x8xf32>
      %c0_34 = arith.constant 0 : index
      %c0_35 = arith.constant 0 : index
      %45 = vector.load %arg13[%c0_34, %c0_35] : memref<16x1xf32, #tpu.memory_space<vmem>>, vector<16x1xf32>
      %46 = tpu.reciprocal %45 : vector<16x1xf32> -> vector<16x1xf32>
      %47 = vector.broadcast %46 : vector<16x1xf32> to vector<16x8xf32>
      %48 = arith.mulf %44, %47 : vector<16x8xf32>
      %c0_36 = arith.constant 0 : index
      %c0_37 = arith.constant 0 : index
      %49 = vector.load %arg15[%c0_36, %c0_37] : memref<16x32xf32, #tpu.memory_space<vmem>>, vector<16x32xf32>
      %c0_38 = arith.constant 0 : index
      %c0_39 = arith.constant 0 : index
      %c0_40 = arith.constant 0 : index
      %50 = vector.load %arg8[%c0_38, %c0_39, %c0_40] : memref<1x8x32xf32, #tpu.memory_space<vmem>>, vector<1x8x32xf32>
      %51 = vector.shape_cast %50 : vector<1x8x32xf32> to vector<8x32xf32>
      %cst_41 = arith.constant dense<0.000000e+00> : vector<16x32xf32>
      %52 = tpu.matmul %48, %51, %cst_41 {dimension_numbers = #tpu.dot_dimension_numbers<[1], [0], [0], [1], [0, 0, 1, 1], [], []>} : vector<16x8xf32>, vector<8x32xf32>, vector<16x32xf32> -> vector<16x32xf32>
      %53 = arith.addf %49, %52 : vector<16x32xf32>
      %c0_42 = arith.constant 0 : index
      %c0_43 = arith.constant 0 : index
      %54 = vector.load %arg15[%c0_42, %c0_43] : memref<16x32xf32, #tpu.memory_space<vmem>>, vector<16x32xf32>
      tpu.vector_store %arg15[%c0_42, %c0_43], %53 {strides = array<i32>} : memref<16x32xf32, #tpu.memory_space<vmem>>, vector<16x32xf32>,
    } else {
    }
    %c3_i32 = arith.constant 3 : i32
    %39 = arith.cmpi eq, %arg2, %c3_i32 : i32
    %c0_i32_30 = arith.constant 0 : i32
    %40 = arith.cmpi eq, %arg3, %c0_i32_30 : i32
    %41 = arith.andi %39, %40 : i1
    %42 = arith.extui %41 : i1 to i32
    %c0_i32_31 = arith.constant 0 : i32
    %43 = arith.cmpi ne, %42, %c0_i32_31 : i32
    scf.if %43 {
      %c0_32 = arith.constant 0 : index
      %c0_33 = arith.constant 0 : index
      %44 = vector.load %arg15[%c0_32, %c0_33] : memref<16x32xf32, #tpu.memory_space<vmem>>, vector<16x32xf32>
      %c0_34 = arith.constant 0 : index
      %c0_35 = arith.constant 0 : index
      %45 = vector.load %arg9[%c0_34, %c0_35] : memref<1x32xf32, #tpu.memory_space<vmem>>, vector<1x32xf32>
      %46 = vector.broadcast %45 : vector<1x32xf32> to vector<16x32xf32>
      %47 = arith.addf %44, %46 : vector<16x32xf32>
      %c0_36 = arith.constant 0 : index
      %c0_37 = arith.constant 0 : index
      %c0_38 = arith.constant 0 : index
      %48 = vector.load %arg10[%c0_36, %c0_37, %c0_38] : memref<1x16x32xf32, #tpu.memory_space<vmem>>, vector<1x16x32xf32>
      %49 = vector.shape_cast %48 : vector<1x16x32xf32> to vector<16x32xf32>
      %50 = vector.shape_cast %47 : vector<16x32xf32> to vector<1x16x32xf32>
      tpu.vector_store %arg10[%c0_36, %c0_37, %c0_38], %50 {strides = array<i32>} : memref<1x16x32xf32, #tpu.memory_space<vmem>>, vector<1x16x32xf32>,
    } else {
    }
    return
  }
  func.func @transform_0(%arg0: i32, %arg1: i32, %arg2: i32, %arg3: i32) -> (i32, i32, i32) {
    %c0_i32 = arith.constant 0 : i32
    %c0_i32_0 = arith.constant 0 : i32
    return %arg0, %arg1, %c0_i32 : i32, i32, i32
  }
  func.func @transform_1(%arg0: i32, %arg1: i32, %arg2: i32, %arg3: i32) -> (i32, i32, i32, i32) {
    %c0_i32 = arith.constant 0 : i32
    %c0_i32_0 = arith.constant 0 : i32
    return %arg0, %arg2, %c0_i32, %arg3 : i32, i32, i32, i32
  }
  func.func @transform_2(%arg0: i32, %arg1: i32, %arg2: i32, %arg3: i32) -> (i32, i32, i32, i32) {
    %c0_i32 = arith.constant 0 : i32
    %c0_i32_0 = arith.constant 0 : i32
    return %arg0, %arg2, %arg3, %c0_i32 : i32, i32, i32, i32
  }
  func.func @transform_3(%arg0: i32, %arg1: i32, %arg2: i32, %arg3: i32) -> (i32, i32, i32) {
    %c0_i32 = arith.constant 0 : i32
    %c0_i32_0 = arith.constant 0 : i32
    %c0_i32_1 = arith.constant 0 : i32
    return %arg2, %c0_i32, %c0_i32_0 : i32, i32, i32
  }
  func.func @transform_4(%arg0: i32, %arg1: i32, %arg2: i32, %arg3: i32) -> (i32, i32, i32) {
    %c0_i32 = arith.constant 0 : i32
    %c0_i32_0 = arith.constant 0 : i32
    %c0_i32_1 = arith.constant 0 : i32
    return %arg2, %c0_i32, %c0_i32_0 : i32, i32, i32
  }
  func.func @transform_5(%arg0: i32, %arg1: i32, %arg2: i32, %arg3: i32) -> (i32, i32) {
    %c0_i32 = arith.constant 0 : i32
    %c0_i32_0 = arith.constant 0 : i32
    %c0_i32_1 = arith.constant 0 : i32
    return %c0_i32, %c0_i32_0 : i32, i32
  }
  func.func @transform_6(%arg0: i32, %arg1: i32, %arg2: i32, %arg3: i32) -> (i32, i32, i32) {
    %c0_i32 = arith.constant 0 : i32
    %c0_i32_0 = arith.constant 0 : i32
    return %arg0, %arg1, %c0_i32 : i32, i32, i32
  }
}

</mosaic_0001>

<llo_original>
// kernel: tpu_custom_call.1
$region0: #{tpu_custom_call.1}
  #allocation0 [shape = 'u32[]', space=smem, size = 0x4, offset = 0x4, fixed_abs, tag = 'smem constant byte address 0x4 - core index']
  #allocation1 [shape = 'u32[72,128]{1,0:T(1,128)}', space=vmem, size = 0x9000, scoped, tag = 'internal scratch']
  #allocation2 [shape = 'f32[16,8]{1,0:T(8,128)}', space=vmem, size = 0x2000, scoped, tag = 'scratch operand']
  #allocation3 [shape = 'f32[16,1]{1,0:T(8,128)}', space=vmem, size = 0x2000, scoped, tag = 'scratch operand']
  #allocation4 [shape = 'f32[16,1]{1,0:T(8,128)}', space=vmem, size = 0x2000, scoped, tag = 'scratch operand']
  #allocation5 [shape = 'f32[16,8]{1,0:T(8,128)}', space=vmem, size = 0x2000, scoped, tag = 'scratch operand']
  #allocation6 [shape = 'f32[16,32]{1,0:T(8,128)}', space=vmem, size = 0x2000, scoped, tag = 'scratch operand']
  %s0 = inlined_call_operand.vmem [shape: f32[2,16,32], index: 0, kind: input, shape index: {}]
  %s1 = inlined_call_operand.vmem [shape: f32[2,4,8,16], index: 1, kind: input, shape index: {}]
  %s2 = inlined_call_operand.vmem [shape: f32[2,4,16,8], index: 2, kind: input, shape index: {}]
  %s3 = inlined_call_operand.vmem [shape: f32[4,32,8], index: 3, kind: input, shape index: {}]
  %s4 = inlined_call_operand.vmem [shape: f32[4,8,32], index: 4, kind: input, shape index: {}]
  %s5 = inlined_call_operand.vmem [shape: f32[1,32], index: 5, kind: input, shape index: {}]
  %s6 = inlined_call_operand.hbm [shape: f32[2,16,32], index: 6, kind: output, shape index: {}]
  %s7 = sld [smem:[#allocation0]]
  $region73: #{tpu_custom_call.1} parent=0
    _
  %s9 = ssub.s32 1, %s7
  %s10 = scalar_select 0, %s9, %s7
  $region1: #{tpu_custom_call.1} parent=0
    #allocation7 [shape = 'u8[16384]{0}', space=vmem, size = 0x4000, scoped, tag = 'output window, operand 0']
    #allocation8 [shape = 's32[2]{0}', space=sflag, size = 0x8, scoped, tag = 'scoped memory for tpu_custom_call.1']
    %11 = vsyncpa [#allocation8], 0
    %s12 = scalar_lea.sflag [#allocation8], 1
    %13 = vsyncpa %s12, 0
    loop: start=0, step=1, limit=10
    $region2: #{tpu_custom_call.1} parent=1 // loop_pre_header
      _
    $region3: #{tpu_custom_call.1} parent=1 // loop_header
      %s15 = sphi 0, %s19
      %p16 = scmp.ge.s32.totalorder %s15, 10
      %s22 = sphi 0, %s48
      %s23 = sphi 0, %s44
      %s24 = sphi 0, %s40
      %s25 = sphi 0, %s36
      %s26 = sphi 0, %s22
      %s27 = sphi 0, %s23
      %s28 = sphi 0, %s24
      %s29 = sphi 0, %s25
      %s30 = sphi 0, %s26
      %s31 = sphi 0, %s27
      %s32 = sphi 0, %s28
      %s33 = sphi 0, %s29
      %s53 = sphi 0, %s55
      %s56 = sphi 0, %s53
      %s57 = sphi 0, %s56
      %s73 = sphi 0, %s57
      %s83 = sphi 0, %s85
      %s86 = sphi 0, %s83
      %s87 = sphi 0, %s86
      %s103 = sphi 0, %s87
      %s113 = sphi 0, %s115
      %s116 = sphi 0, %s113
      %s117 = sphi 0, %s116
      %s133 = sphi 0, %s117
      %s139 = sphi 0, %s141
      %s142 = sphi 0, %s139
      %s143 = sphi 0, %s142
      %s159 = sphi 0, %s143
      %s165 = sphi 0, %s167
      %s168 = sphi 0, %s165
      %s169 = sphi 0, %s168
      %s185 = sphi 0, %s169
      %s189 = sphi 0, %s189
      %s191 = sphi 0, %s189
      %s192 = sphi 0, %s191
      %s206 = sphi 0, %s192
      %s214 = sphi 0, %s216
      %s217 = sphi 0, %s214
      %s218 = sphi 0, %s217
      %s234 = sphi 0, %s218
    $region4: #{tpu_custom_call.1} parent=1 // loop_header_branch
      %18 = sbr.rel (%p16) target = $region8
    $region5: #{tpu_custom_call.1} parent=1 // loop_body
      %s20 = ssub.s32 %s15, 1
      %s21 = ssub.s32 %s15, 2
      %s34 = sadd.s32 1, %s25
      %p35 = scmp.ge.s32.totalorder %s34, 1
      %s36 = scalar_select %p35, 0, %s34
      %s37 = sadd.s32 1, %s24
      %s38 = scalar_select %p35, %s37, %s24
      %p39 = scmp.ge.s32.totalorder %s38, 4
      %s40 = scalar_select %p39, 0, %s38
      %s41 = sadd.s32 1, %s23
      %s42 = scalar_select %p39, %s41, %s23
      %p43 = scmp.ge.s32.totalorder %s42, 1
      %s44 = scalar_select %p43, 0, %s42
      %s45 = sadd.s32 1, %s22
      %s46 = scalar_select %p43, %s45, %s22
      %p47 = scmp.ge.s32.totalorder %s46, 2
      %s48 = scalar_select %p47, 0, %s46
      %s49 = ssub.s32 %s22, %s48
      %s50 = ssub.s32 %s23, %s44
      %s51 = sor.u32 %s49, %s50
      %p52 = scmp.eq.s32.totalorder %s51, 0
      %s54 = sadd.s32 %s53, 1
      %s55 = scalar_select %p52, %s53, %s54
      %p58 = pneg %p52
      %p59 = scmp.eq.s32.totalorder %s15, 7
      %p60 = por %p58, %p59
      %p61 = scmp.ne.s32.totalorder %s53, %s56
      %p62 = scmp.eq.s32.totalorder %s15, 0
      %p63 = por %p61, %p62
      %p64 = scmp.ne.s32.totalorder %s53, %s56
      %p65 = scmp.eq.s32.totalorder %s20, 7
      %p66 = por %p64, %p65
      %p67 = scmp.ne.s32.totalorder %s56, %s57
      %p68 = scmp.eq.s32.totalorder %s20, 0
      %p69 = por %p67, %p68
      %p70 = scmp.ne.s32.totalorder %s56, %s57
      %p71 = scmp.eq.s32.totalorder %s21, 7
      %p72 = por %p70, %p71
      %p74 = scmp.ne.s32.totalorder %s57, %s73
      %p75 = scmp.eq.s32.totalorder %s21, 0
      %p76 = por %p74, %p75
      %s77 = ssub.s32 %s22, %s48
      %s78 = ssub.s32 %s24, %s40
      %s79 = sor.u32 %s77, %s78
      %s80 = ssub.s32 %s25, %s36
      %s81 = sor.u32 %s79, %s80
      %p82 = scmp.eq.s32.totalorder %s81, 0
      %s84 = sadd.s32 %s83, 1
      %s85 = scalar_select %p82, %s83, %s84
      %p88 = pneg %p82
      %p89 = scmp.eq.s32.totalorder %s15, 7
      %p90 = por %p88, %p89
      %p91 = scmp.ne.s32.totalorder %s83, %s86
      %p92 = scmp.eq.s32.totalorder %s15, 0
      %p93 = por %p91, %p92
      %p94 = scmp.ne.s32.totalorder %s83, %s86
      %p95 = scmp.eq.s32.totalorder %s20, 7
      %p96 = por %p94, %p95
      %p97 = scmp.ne.s32.totalorder %s86, %s87
      %p98 = scmp.eq.s32.totalorder %s20, 0
      %p99 = por %p97, %p98
      %p100 = scmp.ne.s32.totalorder %s86, %s87
      %p101 = scmp.eq.s32.totalorder %s21, 7
      %p102 = por %p100, %p101
      %p104 = scmp.ne.s32.totalorder %s87, %s103
      %p105 = scmp.eq.s32.totalorder %s21, 0
      %p106 = por %p104, %p105
      %s107 = ssub.s32 %s22, %s48
      %s108 = ssub.s32 %s24, %s40
      %s109 = sor.u32 %s107, %s108
      %s110 = ssub.s32 %s25, %s36
      %s111 = sor.u32 %s109, %s110
      %p112 = scmp.eq.s32.totalorder %s111, 0
      %s114 = sadd.s32 %s113, 1
      %s115 = scalar_select %p112, %s113, %s114
      %p118 = pneg %p112
      %p119 = scmp.eq.s32.totalorder %s15, 7
      %p120 = por %p118, %p119
      %p121 = scmp.ne.s32.totalorder %s113, %s116
      %p122 = scmp.eq.s32.totalorder %s15, 0
      %p123 = por %p121, %p122
      %p124 = scmp.ne.s32.totalorder %s113, %s116
      %p125 = scmp.eq.s32.totalorder %s20, 7
      %p126 = por %p124, %p125
      %p127 = scmp.ne.s32.totalorder %s116, %s117
      %p128 = scmp.eq.s32.totalorder %s20, 0
      %p129 = por %p127, %p128
      %p130 = scmp.ne.s32.totalorder %s116, %s117
      %p131 = scmp.eq.s32.totalorder %s21, 7
      %p132 = por %p130, %p131
      %p134 = scmp.ne.s32.totalorder %s117, %s133
      %p135 = scmp.eq.s32.totalorder %s21, 0
      %p136 = por %p134, %p135
      %s137 = ssub.s32 %s24, %s40
      %p138 = scmp.eq.s32.totalorder %s137, 0
      %s140 = sadd.s32 %s139, 1
      %s141 = scalar_select %p138, %s139, %s140
      %p144 = pneg %p138
      %p145 = scmp.eq.s32.totalorder %s15, 7
      %p146 = por %p144, %p145
      %p147 = scmp.ne.s32.totalorder %s139, %s142
      %p148 = scmp.eq.s32.totalorder %s15, 0
      %p149 = por %p147, %p148
      %p150 = scmp.ne.s32.totalorder %s139, %s142
      %p151 = scmp.eq.s32.totalorder %s20, 7
      %p152 = por %p150, %p151
      %p153 = scmp.ne.s32.totalorder %s142, %s143
      %p154 = scmp.eq.s32.totalorder %s20, 0
      %p155 = por %p153, %p154
      %p156 = scmp.ne.s32.totalorder %s142, %s143
      %p157 = scmp.eq.s32.totalorder %s21, 7
      %p158 = por %p156, %p157
      %p160 = scmp.ne.s32.totalorder %s143, %s159
      %p161 = scmp.eq.s32.totalorder %s21, 0
      %p162 = por %p160, %p161
      %s163 = ssub.s32 %s24, %s40
      %p164 = scmp.eq.s32.totalorder %s163, 0
      %s166 = sadd.s32 %s165, 1
      %s167 = scalar_select %p164, %s165, %s166
      %p170 = pneg %p164
      %p171 = scmp.eq.s32.totalorder %s15, 7
      %p172 = por %p170, %p171
      %p173 = scmp.ne.s32.totalorder %s165, %s168
      %p174 = scmp.eq.s32.totalorder %s15, 0
      %p175 = por %p173, %p174
      %p176 = scmp.ne.s32.totalorder %s165, %s168
      %p177 = scmp.eq.s32.totalorder %s20, 7
      %p178 = por %p176, %p177
      %p179 = scmp.ne.s32.totalorder %s168, %s169
      %p180 = scmp.eq.s32.totalorder %s20, 0
      %p181 = por %p179, %p180
      %p182 = scmp.ne.s32.totalorder %s168, %s169
      %p183 = scmp.eq.s32.totalorder %s21, 7
      %p184 = por %p182, %p183
      %p186 = scmp.ne.s32.totalorder %s169, %s185
      %p187 = scmp.eq.s32.totalorder %s21, 0
      %p188 = por %p186, %p187
      %s190 = sadd.s32 %s189, 1
      %p193 = scmp.eq.s32.totalorder %s15, 7
      %p194 = scmp.ne.s32.totalorder %s189, %s191
      %p195 = scmp.eq.s32.totalorder %s15, 0
      %p196 = por %p194, %p195
      %p197 = scmp.ne.s32.totalorder %s189, %s191
      %p198 = scmp.eq.s32.totalorder %s20, 7
      %p199 = por %p197, %p198
      %p200 = scmp.ne.s32.totalorder %s191, %s192
      %p201 = scmp.eq.s32.totalorder %s20, 0
      %p202 = por %p200, %p201
      %p203 = scmp.ne.s32.totalorder %s191, %s192
      %p204 = scmp.eq.s32.totalorder %s21, 7
      %p205 = por %p203, %p204
      %p207 = scmp.ne.s32.totalorder %s192, %s206
      %p208 = scmp.eq.s32.totalorder %s21, 0
      %p209 = por %p207, %p208
      %s210 = ssub.s32 %s22, %s48
      %s211 = ssub.s32 %s23, %s44
      %s212 = sor.u32 %s210, %s211
      %p213 = scmp.eq.s32.totalorder %s212, 0
      %s215 = sadd.s32 %s214, 1
      %s216 = scalar_select %p213, %s214, %s215
      %p219 = pneg %p213
      %p220 = scmp.eq.s32.totalorder %s15, 7
      %p221 = por %p219, %p220
      %p222 = scmp.ne.s32.totalorder %s214, %s217
      %p223 = scmp.eq.s32.totalorder %s15, 0
      %p224 = por %p222, %p223
      %p225 = scmp.ne.s32.totalorder %s214, %s217
      %p226 = scmp.eq.s32.totalorder %s20, 7
      %p227 = por %p225, %p226
      %p228 = scmp.ne.s32.totalorder %s217, %s218
      %p229 = scmp.eq.s32.totalorder %s20, 0
      %p230 = por %p228, %p229
      %p231 = scmp.ne.s32.totalorder %s217, %s218
      %p232 = scmp.eq.s32.totalorder %s21, 7
      %p233 = por %p231, %p232
      %p235 = scmp.ne.s32.totalorder %s218, %s234
      %p236 = scmp.eq.s32.totalorder %s21, 0
      %p237 = por %p235, %p236
      %p238 = scmp.le.s32.totalorder 1, %s15
      %p239 = scmp.lt.s32.totalorder %s15, 9
      %p240 = pnand %p238, %p239
      %p241 = pneg %p240
      // Predicated region
      $region9: #{tpu_custom_call.1} parent=5 // pred_check
        _
      $region10: #{tpu_custom_call.1} parent=5 // pred_check_branch
        %243 = sbr.rel (%p240) target = $region12
      $region11: #{tpu_custom_call.1} parent=5 // pred_region
        %s244 = ssub.s32 %s15, 1
        // Predicated region
        $region13: #{tpu_custom_call.1} parent=11 // pred_check
          %p245 = pneg %p202
        $region14: #{tpu_custom_call.1} parent=11 // pred_check_branch
          %247 = sbr.rel (%p245) target = $region16
        $region15: #{tpu_custom_call.1} parent=11 // pred_region
          _
        $region16: #{tpu_custom_call.1} parent=11 // pred_fallthru
          _
      $region12: #{tpu_custom_call.1} parent=5 // pred_fallthru
        _
      %p248 = scmp.lt.s32.totalorder %s15, 8
      // Predicated region
      $region17: #{tpu_custom_call.1} parent=5 // pred_check
        %p249 = pneg %p248
      $region18: #{tpu_custom_call.1} parent=5 // pred_check_branch
        %251 = sbr.rel (%p249) target = $region20
      $region19: #{tpu_custom_call.1} parent=5 // pred_region
        // Predicated region
        $region21: #{tpu_custom_call.1} parent=19 // pred_check
          %p252 = pneg %p63
        $region22: #{tpu_custom_call.1} parent=19 // pred_check_branch
          %254 = sbr.rel (%p252) target = $region24
        $region23: #{tpu_custom_call.1} parent=19 // pred_region
          %s255 = smul.u32 2, %s23
          %p256 = scmp.lt.s32.totalorder %s22, 1
          %s257 = scalar_select %p256, %s22, 1
          %p258 = scmp.lt.s32.totalorder %s255, 1
          %s259 = scalar_select %p258, %s255, 1
          %s260 = smul.addr %s257, 2
          %s261 = sadd.s32 %s259, %s260
          %s262 = smul.addr %s261, 8
          %s263 = scalar_lea.vmem %s0, %s262
          %s264 = smul.u32 2, %s23
        $region24: #{tpu_custom_call.1} parent=19 // pred_fallthru
          _
        // Predicated region
        $region25: #{tpu_custom_call.1} parent=19 // pred_check
          %p265 = pneg %p93
        $region26: #{tpu_custom_call.1} parent=19 // pred_check_branch
          %267 = sbr.rel (%p265) target = $region28
        $region27: #{tpu_custom_call.1} parent=19 // pred_region
          %p268 = scmp.lt.s32.totalorder %s22, 1
          %s269 = scalar_select %p268, %s22, 1
          %p270 = scmp.lt.s32.totalorder %s24, 3
          %s271 = scalar_select %p270, %s24, 3
          %p272 = scmp.lt.s32.totalorder %s25, 0
          %s273 = scalar_select %p272, %s25, 0
          %s274 = sadd.s32 %s273, %s271
          %s275 = smul.addr %s269, 4
          %s276 = sadd.s32 %s274, %s275
          %s277 = smul.addr %s276, 8
          %s278 = scalar_lea.vmem %s1, %s277
        $region28: #{tpu_custom_call.1} parent=19 // pred_fallthru
          _
        // Predicated region
        $region29: #{tpu_custom_call.1} parent=19 // pred_check
          %p279 = pneg %p123
        $region30: #{tpu_custom_call.1} parent=19 // pred_check_branch
          %281 = sbr.rel (%p279) target = $region32
        $region31: #{tpu_custom_call.1} parent=19 // pred_region
          %s282 = smul.u32 2, %s25
          %p283 = scmp.lt.s32.totalorder %s22, 1
          %s284 = scalar_select %p283, %s22, 1
          %p285 = scmp.lt.s32.totalorder %s24, 3
          %s286 = scalar_select %p285, %s24, 3
          %p287 = scmp.lt.s32.totalorder %s282, 1
          %s288 = scalar_select %p287, %s282, 1
          %s289 = smul.addr %s286, 2
          %s290 = sadd.s32 %s288, %s289
          %s291 = smul.addr %s284, 8
          %s292 = sadd.s32 %s290, %s291
          %s293 = smul.addr %s292, 8
          %s294 = scalar_lea.vmem %s2, %s293
          %s295 = smul.u32 2, %s25
        $region32: #{tpu_custom_call.1} parent=19 // pred_fallthru
          _
        // Predicated region
        $region33: #{tpu_custom_call.1} parent=19 // pred_check
          %p296 = pneg %p149
        $region34: #{tpu_custom_call.1} parent=19 // pred_check_branch
          %298 = sbr.rel (%p296) target = $region36
        $region35: #{tpu_custom_call.1} parent=19 // pred_region
          %p299 = scmp.lt.s32.totalorder %s24, 3
          %s300 = scalar_select %p299, %s24, 3
          %s301 = smul.addr %s300, 4
          %s302 = smul.addr %s301, 8
          %s303 = scalar_lea.vmem %s3, %s302
        $region36: #{tpu_custom_call.1} parent=19 // pred_fallthru
          _
        // Predicated region
        $region37: #{tpu_custom_call.1} parent=19 // pred_check
          %p304 = pneg %p175
        $region38: #{tpu_custom_call.1} parent=19 // pred_check_branch
          %306 = sbr.rel (%p304) target = $region40
        $region39: #{tpu_custom_call.1} parent=19 // pred_region
          %p307 = scmp.lt.s32.totalorder %s24, 3
          %s308 = scalar_select %p307, %s24, 3
          %s309 = smul.addr %s308, 8
          %s310 = scalar_lea.vmem %s4, %s309
        $region40: #{tpu_custom_call.1} parent=19 // pred_fallthru
          _
      $region20: #{tpu_custom_call.1} parent=5 // pred_fallthru
        _
      %p311 = scmp.le.s32.totalorder 1, %s15
      %p312 = scmp.lt.s32.totalorder %s15, 9
      %p313 = pnand %p311, %p312
      %p314 = pneg %p313
      // Predicated region
      $region41: #{tpu_custom_call.1} parent=5 // pred_check
        _
      $region42: #{tpu_custom_call.1} parent=5 // pred_check_branch
        %316 = sbr.rel (%p313) target = $region44
      $region43: #{tpu_custom_call.1} parent=5 // pred_region
        %s317 = ssub.s32 %s15, 1
        %s318 = smul.u32 2, %s27
        %p319 = scmp.lt.s32.totalorder %s26, 1
        %s320 = scalar_select %p319, %s26, 1
        %p321 = scmp.lt.s32.totalorder %s318, 1
        %s322 = scalar_select %p321, %s318, 1
        %s323 = smul.addr %s320, 2
        %s324 = sadd.s32 %s322, %s323
        %s325 = smul.addr %s324, 8
        %s326 = scalar_lea.vmem %s0, %s325
        %p327 = pneg %p69
        %p328 = pneg %p66
        %p329 = scmp.lt.s32.totalorder %s26, 1
        %s330 = scalar_select %p329, %s26, 1
        %p331 = scmp.lt.s32.totalorder %s28, 3
        %s332 = scalar_select %p331, %s28, 3
        %p333 = scmp.lt.s32.totalorder %s29, 0
        %s334 = scalar_select %p333, %s29, 0
        %s335 = sadd.s32 %s334, %s332
        %s336 = smul.addr %s330, 4
        %s337 = sadd.s32 %s335, %s336
        %s338 = smul.addr %s337, 8
        %s339 = scalar_lea.vmem %s1, %s338
        %p340 = pneg %p99
        %p341 = pneg %p96
        %s342 = smul.u32 2, %s29
        %p343 = scmp.lt.s32.totalorder %s26, 1
        %s344 = scalar_select %p343, %s26, 1
        %p345 = scmp.lt.s32.totalorder %s28, 3
        %s346 = scalar_select %p345, %s28, 3
        %p347 = scmp.lt.s32.totalorder %s342, 1
        %s348 = scalar_select %p347, %s342, 1
        %s349 = smul.addr %s346, 2
        %s350 = sadd.s32 %s348, %s349
        %s351 = smul.addr %s344, 8
        %s352 = sadd.s32 %s350, %s351
        %s353 = smul.addr %s352, 8
        %s354 = scalar_lea.vmem %s2, %s353
        %p355 = pneg %p129
        %p356 = pneg %p126
        %p357 = scmp.lt.s32.totalorder %s28, 3
        %s358 = scalar_select %p357, %s28, 3
        %s359 = smul.addr %s358, 4
        %s360 = smul.addr %s359, 8
        %s361 = scalar_lea.vmem %s3, %s360
        %p362 = pneg %p155
        %p363 = pneg %p152
        %p364 = scmp.lt.s32.totalorder %s28, 3
        %s365 = scalar_select %p364, %s28, 3
        %s366 = smul.addr %s365, 8
        %s367 = scalar_lea.vmem %s4, %s366
        %p368 = pneg %p181
        %p369 = pneg %p178
        %p370 = pneg %p202
        %p371 = pneg %p199
        %p372 = pneg %p230
        %p373 = pneg %p227
        %s374 = sand.u32 %s217, 1
        %s375 = scalar_lea.sflag [#allocation8], %s374
        %s376 = sand.u32 %s217, 1
        %s377 = smul.addr %s376, 16
        %s378 = scalar_lea.vmem [#allocation7], %s377
        %s379 = smul.u32 2, %s27
        %p380 = scmp.lt.s32.totalorder %s26, 1
        %s381 = scalar_select %p380, %s26, 1
        %p382 = scmp.lt.s32.totalorder %s379, 1
        %s383 = scalar_select %p382, %s379, 1
        %s384 = smul.addr %s381, 2
        %s385 = sadd.s32 %s383, %s384
        %s386 = smul.addr %s385, 8
        %s387 = scalar_lea.vmem %s0, %s386
        %s388 = smul.u32 2, %s27
        %p389 = scmp.lt.s32.totalorder %s26, 1
        %s390 = scalar_select %p389, %s26, 1
        %p391 = scmp.lt.s32.totalorder %s28, 3
        %s392 = scalar_select %p391, %s28, 3
        %p393 = scmp.lt.s32.totalorder %s29, 0
        %s394 = scalar_select %p393, %s29, 0
        %s395 = sadd.s32 %s394, %s392
        %s396 = smul.addr %s390, 4
        %s397 = sadd.s32 %s395, %s396
        %s398 = smul.addr %s397, 8
        %s399 = scalar_lea.vmem %s1, %s398
        %s400 = smul.u32 2, %s29
        %p401 = scmp.lt.s32.totalorder %s26, 1
        %s402 = scalar_select %p401, %s26, 1
        %p403 = scmp.lt.s32.totalorder %s28, 3
        %s404 = scalar_select %p403, %s28, 3
        %p405 = scmp.lt.s32.totalorder %s400, 1
        %s406 = scalar_select %p405, %s400, 1
        %s407 = smul.addr %s404, 2
        %s408 = sadd.s32 %s406, %s407
        %s409 = smul.addr %s402, 8
        %s410 = sadd.s32 %s408, %s409
        %s411 = smul.addr %s410, 8
        %s412 = scalar_lea.vmem %s2, %s411
        %s413 = smul.u32 2, %s29
        %p414 = scmp.lt.s32.totalorder %s28, 3
        %s415 = scalar_select %p414, %s28, 3
        %s416 = smul.addr %s415, 4
        %s417 = smul.addr %s416, 8
        %s418 = scalar_lea.vmem %s3, %s417
        %p419 = scmp.lt.s32.totalorder %s28, 3
        %s420 = scalar_select %p419, %s28, 3
        %s421 = smul.addr %s420, 8
        %s422 = scalar_lea.vmem %s4, %s421
        %s423 = smul.u32 2, %s27
        %p424 = scmp.eq.s32.totalorder %s28, 0
        %p425 = scmp.eq.s32.totalorder %s29, 0
        %p426 = pnand %p424, %p425
        %p427 = pneg %p426
        // Predicated region
        $region45: #{tpu_custom_call.1} parent=43 // pred_check
          _
        $region46: #{tpu_custom_call.1} parent=43 // pred_check_branch
          %429 = sbr.rel (%p426) target = $region48
        $region47: #{tpu_custom_call.1} parent=43 // pred_region
          %vm430 = vcmask 261120
          %431 = vst.msk [vmem:[#allocation6] sm:$0xff] %vm430, 0.0
          %432 = vst.msk [vmem:[#allocation6 + $0x8] sm:$0xff] %vm430, 0.0
        $region48: #{tpu_custom_call.1} parent=43 // pred_fallthru
          _
        // Predicated region
        $region49: #{tpu_custom_call.1} parent=43 // pred_check
          %p433 = pneg %p425
        $region50: #{tpu_custom_call.1} parent=43 // pred_check_branch
          %435 = sbr.rel (%p433) target = $region52
        $region51: #{tpu_custom_call.1} parent=43 // pred_region
          %v436 = vld [vmem:[%s387] sm:$0xff]
          %v437 = vld [vmem:[%s387 + $0x8] sm:$0xff]
          %v438 = vld [vmem:[%s418] sm:$0xff]
          %v439 = vld [vmem:[%s418 + $0x8] sm:$0xff]
          %v440 = vld [vmem:[%s418 + $0x10] sm:$0xff]
          %v441 = vld [vmem:[%s418 + $0x18] sm:$0xff]
          %vm442 = vcmask 261120
          %v444 = vsel %vm442, %v436, 0
          %v447 = vsel %vm442, %v437, 0
          %449 = vmatpush.msra.mxu0 0.0
          %450 = vmatpush.msra.mxu0 0.0
          %451 = vmatpush.msra.mxu0 0.0
          %452 = vmatpush.msra.mxu0 0.0
          %453 = vmatpush.msra.mxu0 0.0
          %454 = vmatpush.msra.mxu0 0.0
          %455 = vmatpush.msra.mxu0 0.0
          %456 = vmatpush.msra.mxu0 0.0
          %457 = vmatpush.msra.mxu0 0.0
          %458 = vmatpush.msra.mxu0 0.0
          %459 = vmatpush.msra.mxu0 0.0
          %460 = vmatpush.msra.mxu0 0.0
          %461 = vmatpush.msra.mxu0 %v441
          %462 = vmatpush.msra.mxu0 %v440
          %463 = vmatpush.msra.mxu0 %v439
          %464 = vmatpush.msra.mxu0 %v438
          %465 = vmatmul.f32.gmra.mxu0 %v444
          %v466 = vpop.f32.mrf.mxu0
          %v467 = vadd.f32 0.0, %v466
          %468 = vmatmul.f32.gmra.mxu0 %v447
          %v469 = vpop.f32.mrf.mxu0
          %v470 = vadd.f32 0.0, %v469
          %471 = vdwg.mxu0
          %v472 = vmul.f32 %v467, 0.35355338
          %v473 = vmul.f32 %v470, 0.35355338
          %vm474 = vcmask 64512
          %475 = vst.msk [vmem:[#allocation2] sm:$0xff] %vm474, %v472
          %476 = vst.msk [vmem:[#allocation2 + $0x8] sm:$0xff] %vm474, %v473
          %vm477 = vcmask 7168
          %478 = vst.msk [vmem:[#allocation3] sm:$0xff] %vm477, -inf
          %479 = vst.msk [vmem:[#allocation3 + $0x8] sm:$0xff] %vm477, -inf
          %480 = vst.msk [vmem:[#allocation4] sm:$0xff] %vm477, 0.0
          %481 = vst.msk [vmem:[#allocation4 + $0x8] sm:$0xff] %vm477, 0.0
          %482 = vst.msk [vmem:[#allocation5] sm:$0xff] %vm474, 0.0
          %483 = vst.msk [vmem:[#allocation5 + $0x8] sm:$0xff] %vm474, 0.0
        $region52: #{tpu_custom_call.1} parent=43 // pred_fallthru
          _
        %v484 = vld [vmem:[%s399] sm:$0xff]
        %v485 = vld [vmem:[%s412] sm:$0xff]
        %v486 = vld [vmem:[%s412 + $0x8] sm:$0xff]
        %v487 = vld [vmem:[#allocation2] sm:$0xff]
        %v488 = vld [vmem:[#allocation2 + $0x8] sm:$0xff]
        %vm489 = vcmask 64512
        %v491 = vsel %vm489, %v487, 0
        %v494 = vsel %vm489, %v488, 0
        %496 = vmatpush.msra.mxu0 0.0
        %497 = vmatpush.msra.mxu0 0.0
        %498 = vmatpush.msra.mxu0 0.0
        %499 = vmatpush.msra.mxu0 0.0
        %500 = vmatpush.msra.mxu0 0.0
        %501 = vmatpush.msra.mxu0 0.0
        %502 = vmatpush.msra.mxu0 0.0
        %503 = vmatpush.msra.mxu0 0.0
        %504 = vmatpush.msra.mxu0 0.0
        %505 = vmatpush.msra.mxu0 0.0
        %506 = vmatpush.msra.mxu0 0.0
        %507 = vmatpush.msra.mxu0 0.0
        %508 = vmatpush.msra.mxu0 0.0
        %509 = vmatpush.msra.mxu0 0.0
        %510 = vmatpush.msra.mxu0 0.0
        %511 = vmatpush.msra.mxu0 %v484
        %512 = vmatmul.f32.gmra.mxu0 %v491
        %v513 = vpop.f32.mrf.mxu0
        %v514 = vadd.f32 0.0, %v513
        %515 = vmatmul.f32.gmra.mxu0 %v494
        %v516 = vpop.f32.mrf.mxu0
        %v517 = vadd.f32 0.0, %v516
        %518 = vdwg.mxu0
        %v519 = vld [vmem:[#allocation3] sm:$0xff]
        %v520 = vld [vmem:[#allocation3 + $0x8] sm:$0xff]
        %vm521 = vcmask 130048
        %v522 = vsel %vm521, %v514, -inf
        %523 = vmax.xlane.f32.xlu0 %v522
        %v524 = vpop.xlane.xlu0 %523
        %v525 = vsel %vm521, %v517, -inf
        %526 = vmax.xlane.f32.xlu0 %v525
        %v527 = vpop.xlane.xlu0 %526
        %v528 = vmax.f32 %v519, %v524
        %v529 = vmax.f32 %v520, %v527
        %v530 = vsub.f32 %v519, %v528
        %v531 = vsub.f32 %v520, %v529
        %v532 = vmul.f32 %v530, 1.442695
        %v533 = vpow.pop %v532
        %v534 = vmul.f32 %v531, 1.442695
        %v535 = vpow.pop %v534
        %537 = vset.pattern.permute.xlu0 0
        %538 = vperm.xlu0 %537, %v528
        %v539 = vpop.permute.xlu0 %538
        %542 = vset.pattern.permute.xlu0 0
        %543 = vperm.xlu0 %542, %v529
        %v544 = vpop.permute.xlu0 %543
        %v546 = vsub.f32 %v514, %v539
        %v547 = vsub.f32 %v517, %v544
        %v548 = vmul.f32 %v546, 1.442695
        %v549 = vpow.pop %v548
        %v550 = vmul.f32 %v547, 1.442695
        %v551 = vpow.pop %v550
        %v552 = vld [vmem:[#allocation4] sm:$0xff]
        %v553 = vld [vmem:[#allocation4 + $0x8] sm:$0xff]
        %v554 = vmul.f32 %v533, %v552
        %v555 = vmul.f32 %v535, %v553
        %v556 = vsel %vm521, %v549, 0.0
        %557 = vadd.xlane.f32.xlu0 %v556
        %v558 = vpop.xlane.xlu0 %557
        %v559 = vsel %vm521, %v551, 0.0
        %560 = vadd.xlane.f32.xlu0 %v559
        %v561 = vpop.xlane.xlu0 %560
        %v562 = vadd.f32 %v554, %v558
        %v563 = vadd.f32 %v555, %v561
        %vm564 = vcmask 7168
        %565 = vst.msk [vmem:[#allocation4] sm:$0xff] %vm564, %v562
        %566 = vst.msk [vmem:[#allocation4 + $0x8] sm:$0xff] %vm564, %v563
        %v567 = vld [vmem:[#allocation5] sm:$0xff]
        %v568 = vld [vmem:[#allocation5 + $0x8] sm:$0xff]
        %570 = vset.pattern.permute.xlu0 0
        %571 = vperm.xlu0 %570, %v533
        %v572 = vpop.permute.xlu0 %571
        %575 = vset.pattern.permute.xlu0 0
        %576 = vperm.xlu0 %575, %v535
        %v577 = vpop.permute.xlu0 %576
        %v579 = vmul.f32 %v572, %v567
        %v580 = vmul.f32 %v577, %v568
        %v582 = vsel %vm521, %v549, 0
        %v585 = vsel %vm521, %v551, 0
        %587 = vmatpush.msra.mxu0 0.0
        %588 = vmatpush.msra.mxu0 0.0
        %589 = vmatpush.msra.mxu0 0.0
        %590 = vmatpush.msra.mxu0 0.0
        %591 = vmatpush.msra.mxu0 0.0
        %592 = vmatpush.msra.mxu0 0.0
        %593 = vmatpush.msra.mxu0 0.0
        %594 = vmatpush.msra.mxu0 0.0
        %595 = vmatpush.msra.mxu0 0.0
        %596 = vmatpush.msra.mxu0 0.0
        %597 = vmatpush.msra.mxu0 0.0
        %598 = vmatpush.msra.mxu0 0.0
        %599 = vmatpush.msra.mxu0 0.0
        %600 = vmatpush.msra.mxu0 0.0
        %601 = vmatpush.msra.mxu0 %v486
        %602 = vmatpush.msra.mxu0 %v485
        %603 = vmatmul.f32.gmra.mxu0 %v582
        %v604 = vpop.f32.mrf.mxu0
        %v605 = vadd.f32 0.0, %v604
        %606 = vmatmul.f32.gmra.mxu0 %v585
        %v607 = vpop.f32.mrf.mxu0
        %v608 = vadd.f32 0.0, %v607
        %609 = vdwg.mxu0
        %v610 = vadd.f32 %v579, %v605
        %v611 = vadd.f32 %v580, %v608
        %612 = vst.msk [vmem:[#allocation5] sm:$0xff] %vm489, %v610
        %613 = vst.msk [vmem:[#allocation5 + $0x8] sm:$0xff] %vm489, %v611
        %614 = vst.msk [vmem:[#allocation3] sm:$0xff] %vm564, %v528
        %615 = vst.msk [vmem:[#allocation3 + $0x8] sm:$0xff] %vm564, %v529
        // Predicated region
        $region53: #{tpu_custom_call.1} parent=43 // pred_check
          %p616 = pneg %p425
        $region54: #{tpu_custom_call.1} parent=43 // pred_check_branch
          %618 = sbr.rel (%p616) target = $region56
        $region55: #{tpu_custom_call.1} parent=43 // pred_region
          %v619 = vld [vmem:[#allocation5] sm:$0xff]
          %v620 = vld [vmem:[#allocation5 + $0x8] sm:$0xff]
          %v621 = vld [vmem:[#allocation4] sm:$0xff]
          %v622 = vld [vmem:[#allocation4 + $0x8] sm:$0xff]
          %v623 = vrcp.pop %v621
          %v624 = vmul.f32 %v621, %v623
          %v625 = vsub.f32 1.0, %v624
          %v626 = vmul.f32 %v623, %v625
          %v627 = vadd.f32 %v623, %v626
          %vm628 = vweird.f32 %v621
          %vm629 = vweird.f32 %v623
          %vm630 = vmor %vm628, %vm629
          %v631 = vsel %vm630, %v623, %v627
          %v632 = vand.u32 2147483647, %v621
          %vm633 = vcmp.eq.f32.partialorder %v632, 8.507059e+37
          %v634 = vand.u32 %v621, 2147483648
          %v635 = vor.u32 1.1754944e-38, %v634
          %v636 = vsel %vm633, %v635, %v631
          %v637 = vrcp.pop %v622
          %v638 = vmul.f32 %v622, %v637
          %v639 = vsub.f32 1.0, %v638
          %v640 = vmul.f32 %v637, %v639
          %v641 = vadd.f32 %v637, %v640
          %vm642 = vweird.f32 %v622
          %vm643 = vweird.f32 %v637
          %vm644 = vmor %vm642, %vm643
          %v645 = vsel %vm644, %v637, %v641
          %v646 = vand.u32 2147483647, %v622
          %vm647 = vcmp.eq.f32.partialorder %v646, 8.507059e+37
          %v648 = vand.u32 %v622, 2147483648
          %v649 = vor.u32 1.1754944e-38, %v648
          %v650 = vsel %vm647, %v649, %v645
          %652 = vset.pattern.permute.xlu0 0
          %653 = vperm.xlu0 %652, %v636
          %v654 = vpop.permute.xlu0 %653
          %657 = vset.pattern.permute.xlu0 0
          %658 = vperm.xlu0 %657, %v650
          %v659 = vpop.permute.xlu0 %658
          %v661 = vmul.f32 %v619, %v654
          %v662 = vmul.f32 %v620, %v659
          %v663 = vld [vmem:[#allocation6] sm:$0xff]
          %v664 = vld [vmem:[#allocation6 + $0x8] sm:$0xff]
          %v665 = vld [vmem:[%s422] sm:$0xff]
          %v667 = vsel %vm489, %v661, 0
          %v670 = vsel %vm489, %v662, 0
          %672 = vmatpush.msra.mxu0 0.0
          %673 = vmatpush.msra.mxu0 0.0
          %674 = vmatpush.msra.mxu0 0.0
          %675 = vmatpush.msra.mxu0 0.0
          %676 = vmatpush.msra.mxu0 0.0
          %677 = vmatpush.msra.mxu0 0.0
          %678 = vmatpush.msra.mxu0 0.0
          %679 = vmatpush.msra.mxu0 0.0
          %680 = vmatpush.msra.mxu0 0.0
          %681 = vmatpush.msra.mxu0 0.0
          %682 = vmatpush.msra.mxu0 0.0
          %683 = vmatpush.msra.mxu0 0.0
          %684 = vmatpush.msra.mxu0 0.0
          %685 = vmatpush.msra.mxu0 0.0
          %686 = vmatpush.msra.mxu0 0.0
          %687 = vmatpush.msra.mxu0 %v665
          %688 = vmatmul.f32.gmra.mxu0 %v667
          %v689 = vpop.f32.mrf.mxu0
          %v690 = vadd.f32 0.0, %v689
          %691 = vmatmul.f32.gmra.mxu0 %v670
          %v692 = vpop.f32.mrf.mxu0
          %v693 = vadd.f32 0.0, %v692
          %694 = vdwg.mxu0
          %v695 = vadd.f32 %v663, %v690
          %v696 = vadd.f32 %v664, %v693
          %vm697 = vcmask 261120
          %698 = vst.msk [vmem:[#allocation6] sm:$0xff] %vm697, %v695
          %699 = vst.msk [vmem:[#allocation6 + $0x8] sm:$0xff] %vm697, %v696
        $region56: #{tpu_custom_call.1} parent=43 // pred_fallthru
          _
        %p700 = scmp.eq.s32.totalorder %s28, 3
        %p701 = pnand %p700, %p425
        %p702 = pneg %p701
        // Predicated region
        $region57: #{tpu_custom_call.1} parent=43 // pred_check
          _
        $region58: #{tpu_custom_call.1} parent=43 // pred_check_branch
          %704 = sbr.rel (%p701) target = $region60
        $region59: #{tpu_custom_call.1} parent=43 // pred_region
          %v705 = vld [vmem:[#allocation6] sm:$0xff]
          %v706 = vld [vmem:[#allocation6 + $0x8] sm:$0xff]
          %v707 = vld [vmem:[%s5] sm:$0x1]
          %v709 = vperm.slane %v707, 0
          %v711 = vadd.f32 %v705, %v709
          %v712 = vadd.f32 %v706, %v709
          %vm713 = vcmask 261120
          %714 = vst.msk [vmem:[%s378] sm:$0xff] %vm713, %v711
          %715 = vst.msk [vmem:[%s378 + $0x8] sm:$0xff] %vm713, %v712
        $region60: #{tpu_custom_call.1} parent=43 // pred_fallthru
          _
        %s716 = sand.u32 %s217, 1
        %s717 = scalar_lea.sflag [#allocation8], %s716
        %s718 = sand.u32 %s217, 1
        %s719 = smul.addr %s718, 16
        %s720 = scalar_lea.vmem [#allocation7], %s719
        // Predicated region
        $region61: #{tpu_custom_call.1} parent=43 // pred_check
          %p721 = pneg %p227
        $region62: #{tpu_custom_call.1} parent=43 // pred_check_branch
          %723 = sbr.rel (%p721) target = $region64
        $region63: #{tpu_custom_call.1} parent=43 // pred_region
          %s724 = smul.u32 2, %s27
          %726 = vsyncadd %s717, 0
          %s727 = smul.addr %s26, 2
          %s728 = sadd.s32 %s724, %s727
          %s729 = smul.addr %s728, 8
          %s730 = scalar_lea.hbm %s6, %s729
          %s731 = sshll.u32 %s720, 4
          %s732 = int_to_ptr.vmem [resolvable:$true] %s731
          %s733 = sshll.u32 %s730, 4
          %s734 = int_to_ptr.hbm [resolvable:$true] %s733
          %739 = dma.vmem_to_hbm [thread:$0]  %s732, 256, %s734, %s717, 128, 128, 8
        $region64: #{tpu_custom_call.1} parent=43 // pred_fallthru
          _
      $region44: #{tpu_custom_call.1} parent=5 // pred_fallthru
        _
      %p740 = scmp.le.s32.totalorder 2, %s15
      // Predicated region
      $region65: #{tpu_custom_call.1} parent=5 // pred_check
        %p741 = pneg %p740
      $region66: #{tpu_custom_call.1} parent=5 // pred_check_branch
        %743 = sbr.rel (%p741) target = $region68
      $region67: #{tpu_custom_call.1} parent=5 // pred_region
        %s744 = ssub.s32 %s15, 2
        // Predicated region
        $region69: #{tpu_custom_call.1} parent=67 // pred_check
          %p745 = pneg %p233
        $region70: #{tpu_custom_call.1} parent=67 // pred_check_branch
          %747 = sbr.rel (%p745) target = $region72
        $region71: #{tpu_custom_call.1} parent=67 // pred_region
          %s748 = sand.u32 %s218, 1
          %s749 = scalar_lea.sflag [#allocation8], %s748
          %s750 = sand.u32 %s218, 1
          %s751 = smul.addr %s750, 16
          %s752 = scalar_lea.vmem [#allocation7], %s751
          %754 = dma.done %s749, 256
        $region72: #{tpu_custom_call.1} parent=67 // pred_fallthru
          _
      $region68: #{tpu_custom_call.1} parent=5 // pred_fallthru
        _
    $region6: #{tpu_custom_call.1} parent=1 // loop_footer
      %s19 = sadd.s32 1, %s15
    $region7: #{tpu_custom_call.1} parent=1 // loop_footer_branch
      %14 = sbr.rel target = $region3
    $region8: #{tpu_custom_call.1} parent=1 // loop_exit
      _
    %755 = vsyncpa [#allocation8], 1
    %s756 = scalar_lea.sflag [#allocation8], 1
    %757 = vsyncpa %s756, 1

</llo_original>
